<compile_context>
chip_gen: v5e
topology: v5e:2x2
jax: 0.10.0
libtpu: 0.0.40
codegen_flags: <defaults>
</compile_context>

<pallas_src>
import functools
import math

import jax
import jax.numpy as jnp
from jax.experimental import pallas as pl
from jax.experimental.pallas import tpu as pltpu

D_MODEL = 32
MAX_LEN = 5000
DROPOUT_P = 0.1


def build_pe_table(d_model: int, max_len: int) -> jnp.ndarray:
    """Deterministic sinusoidal table, identical to the PyTorch __init__."""
    position = jnp.arange(max_len, dtype=jnp.float32)[:, None]            # (L, 1)
    div_term = jnp.exp(
        jnp.arange(0, d_model, 2, dtype=jnp.float32) * (-math.log(10000.0) / d_model)
    )                                                                      # (D/2,)
    pe = jnp.zeros((max_len, d_model), dtype=jnp.float32)
    pe = pe.at[:, 0::2].set(jnp.sin(position * div_term))
    pe = pe.at[:, 1::2].set(jnp.cos(position * div_term))
    # unsqueeze(0).transpose(0, 1) -> (max_len, 1, d_model)
    return pe[:, None, :]


def _choose_tile_s(seq_len: int, lane_width: int, itemsize: int,
                   target_block_bytes: int = 2 << 20) -> int:
    """Rows per block so each buffered input block stays ~<=2 MiB.

    Keeps 2 inputs x 2 pipeline buffers + output well inside the scoped VMEM
    budget on every generation (v5e 16 MiB, v6e 32 MiB, v7x 32/64 MiB).
    Returned value is either the full seq_len or a multiple of 8 (sublane rule).
    """
    rows = (target_block_bytes // max(1, lane_width * itemsize)) // 8 * 8
    rows = max(8, rows)
    return seq_len if rows >= seq_len else rows


def _pe_add_dropout_kernel(x_ref, pe_ref, bits_ref, o_ref, *,
                           batch, keep_threshold, scale):
    # x_ref / bits_ref / o_ref: (TILE_S, B*D) lane-dense; pe_ref: (TILE_S, D).
    # Broadcast pe over the batch lanes: lane index of x2 is b*D + d.
    y = x_ref[...] + jnp.tile(pe_ref[...], (1, batch))
    # Inverted dropout, integer-space compare: keep iff bits >= p * 2^32.
    keep = bits_ref[...] >= jnp.uint32(keep_threshold)
    o_ref[...] = jnp.where(keep, y * jnp.float32(scale), jnp.float32(0.0))


def _pe_add_kernel(x_ref, pe_ref, o_ref, *, batch):
    # Eval mode: dropout is identity.
    o_ref[...] = x_ref[...] + jnp.tile(pe_ref[...], (1, batch))


def positional_encoding(x, pe_table, *, training=False, dropout_p=DROPOUT_P,
                        rng_key=None):
    """x: (S, B, D) float32 (sequence-major, like the PyTorch module).

    Returns (S, B, D) float32 = dropout(x + pe[:S]).
    """
    S, B, D = x.shape
    BD = B * D

    # Lane-dense 2-D views: free row-major reshape / squeeze in the wrapper.
    x2 = x.reshape(S, BD)                 # lane index = b*D + d
    pe2 = pe_table[:S, 0, :]              # (S, D) — drop the size-1 batch axis

    tile_s = _choose_tile_s(S, BD, jnp.dtype(x.dtype).itemsize)
    grid = (pl.cdiv(S, tile_s),)

    # Last dims equal the full array extents (BD, D), so the (8,128) rule is
    # satisfied even when B*D / D are not multiples of 128.
    x_spec = pl.BlockSpec((tile_s, BD), lambda i: (i, 0))
    pe_spec = pl.BlockSpec((tile_s, D), lambda i: (i, 0))
    out_spec = pl.BlockSpec((tile_s, BD), lambda i: (i, 0))
    out_shape = jax.ShapeDtypeStruct((S, BD), x.dtype)
    cparams = pltpu.CompilerParams(dimension_semantics=("parallel",))

    if training and dropout_p > 0.0:
        if rng_key is None:
            rng_key = jax.random.PRNGKey(0)
        # Portable RNG: uniform uint32 bits generated outside the kernel.
        # Each grid tile automatically gets its own slice -> distinct masks.
        # TODO(synk): RNG stream differs from torch's nn.Dropout (same Bernoulli(p) semantics).
        bits = jax.random.bits(rng_key, (S, BD), dtype=jnp.uint32)
        keep_threshold = min(int(round(dropout_p * float(1 << 32))), (1 << 32) - 1)
        scale = 1.0 / (1.0 - dropout_p)
        kern = functools.partial(_pe_add_dropout_kernel, batch=B,
                                 keep_threshold=keep_threshold, scale=scale)
        out2 = pl.pallas_call(
            kern,
            out_shape=out_shape,
            grid=grid,
            in_specs=[x_spec, pe_spec, x_spec],   # bits share x's tiling
            out_specs=out_spec,
            compiler_params=cparams,
        )(x2, pe2, bits)
    else:
        kern = functools.partial(_pe_add_kernel, batch=B)
        out2 = pl.pallas_call(
            kern,
            out_shape=out_shape,
            grid=grid,
            in_specs=[x_spec, pe_spec],
            out_specs=out_spec,
            compiler_params=cparams,
        )(x2, pe2)

    return out2.reshape(S, B, D)


if __name__ == "__main__":
    key = jax.random.PRNGKey(0)
    S, B, D = 8, 2, D_MODEL
    x = jax.random.normal(key, (S, B, D), dtype=jnp.float32)

    pe_table = build_pe_table(D_MODEL, MAX_LEN)

    # eval mode (identity dropout): verify against plain-JAX reference
    out_eval = positional_encoding(x, pe_table, training=False)
    out_eval = jax.block_until_ready(out_eval)
    ref = x + pe_table[:S]
    assert out_eval.shape == (S, B, D)
    assert jnp.allclose(out_eval, ref, atol=1e-6), "eval-mode mismatch"

    # training mode (inverted dropout with externally generated bits)
    out_train = positional_encoding(
        x, pe_table, training=True, rng_key=jax.random.PRNGKey(1234))
    out_train = jax.block_until_ready(out_train)
    assert out_train.shape == (S, B, D)
    assert bool(jnp.all(jnp.isfinite(out_train)))
    # every element must be either exactly 0 (dropped) or (x+pe)/(1-p) (kept)
    scaled = ref / (1.0 - DROPOUT_P)
    kept_ok = jnp.isclose(out_train, scaled, rtol=1e-5, atol=1e-6)
    dropped = out_train == 0.0
    assert bool(jnp.all(kept_ok | dropped)), "dropout semantics mismatch"
    assert bool(jnp.any(kept_ok)), "dropout dropped everything"

    print("KERNEL_OK")
</pallas_src>

<mosaic_0001>
module attributes {stable_mosaic.version = 11 : i64} {
  func.func @_pe_add_kernel(%arg0: i32, %arg1: memref<8x64xf32, #tpu.memory_space<vmem>>, %arg2: memref<8x32xf32, #tpu.memory_space<vmem>>, %arg3: memref<8x64xf32, #tpu.memory_space<vmem>>) attributes {dimension_semantics = [#tpu.dimension_semantics<parallel>], iteration_bounds = array<i64: 1>, scalar_prefetch = 0 : i64, scratch_operands = 0 : i64, tpu.core_type = #tpu.core_type<tc>, window_params = [{transform_indices = @transform_0, window_bounds = array<i64: 8, 64>}, {transform_indices = @transform_1, window_bounds = array<i64: 8, 32>}, {transform_indices = @transform_2, window_bounds = array<i64: 8, 64>}]} {
    %c0 = arith.constant 0 : index
    %c0_0 = arith.constant 0 : index
    %0 = vector.load %arg1[%c0, %c0_0] : memref<8x64xf32, #tpu.memory_space<vmem>>, vector<8x64xf32>
    %c0_1 = arith.constant 0 : index
    %c0_2 = arith.constant 0 : index
    %1 = vector.load %arg2[%c0_1, %c0_2] : memref<8x32xf32, #tpu.memory_space<vmem>>, vector<8x32xf32>
    %2 = tpu.concatenate %1, %1 in 1 : vector<8x32xf32>, vector<8x32xf32> -> vector<8x64xf32>
    %3 = arith.addf %0, %2 : vector<8x64xf32>
    %c0_3 = arith.constant 0 : index
    %c0_4 = arith.constant 0 : index
    %4 = vector.load %arg3[%c0_3, %c0_4] : memref<8x64xf32, #tpu.memory_space<vmem>>, vector<8x64xf32>
    tpu.vector_store %arg3[%c0_3, %c0_4], %3 {strides = array<i32>} : memref<8x64xf32, #tpu.memory_space<vmem>>, vector<8x64xf32>,
    return
  }
  func.func @transform_0(%arg0: i32) -> (i32, i32) {
    %c0_i32 = arith.constant 0 : i32
    %c0_i32_0 = arith.constant 0 : i32
    return %arg0, %c0_i32 : i32, i32
  }
  func.func @transform_1(%arg0: i32) -> (i32, i32) {
    %c0_i32 = arith.constant 0 : i32
    %c0_i32_0 = arith.constant 0 : i32
    return %arg0, %c0_i32 : i32, i32
  }
  func.func @transform_2(%arg0: i32) -> (i32, i32) {
    %c0_i32 = arith.constant 0 : i32
    %c0_i32_0 = arith.constant 0 : i32
    return %arg0, %c0_i32 : i32, i32
  }
}

</mosaic_0001>

<llo_original>
// kernel: tpu_custom_call.1
$region0: #{tpu_custom_call.1}
  #allocation0 [shape = 'u32[]', space=smem, size = 0x4, offset = 0x4, fixed_abs, tag = 'smem constant byte address 0x4 - core index']
  #allocation1 [shape = 'u32[72,128]{1,0:T(1,128)}', space=vmem, size = 0x9000, scoped, tag = 'internal scratch']
  %s0 = inlined_call_operand.hbm [shape: f32[8,64], index: 0, kind: input, shape index: {}]
  %s1 = inlined_call_operand.hbm [shape: f32[8,32], index: 1, kind: input, shape index: {}]
  %s2 = inlined_call_operand.hbm [shape: f32[8,64], index: 2, kind: output, shape index: {}]
  %s3 = sld [smem:[#allocation0]]
  $region26: #{tpu_custom_call.1} parent=0
    _
  %s5 = ssub.s32 1, %s3
  %s6 = scalar_select 0, %s5, %s3
  $region1: #{tpu_custom_call.1} parent=0
    #allocation2 [shape = 'u8[4096]{0}', space=vmem, size = 0x1000, scoped, tag = 'input window, operand 0, single buffered']
    #allocation3 [shape = 's32[1]{0}', space=sflag, size = 0x4, scoped, tag = 'scoped memory for tpu_custom_call.1']
    #allocation4 [shape = 's32[1]{0}', space=sflag, size = 0x4, scoped, tag = 'scoped memory for tpu_custom_call.1']
    #allocation5 [shape = 'u8[4096]{0}', space=vmem, size = 0x1000, scoped, tag = 'input window, operand 1, single buffered']
    #allocation6 [shape = 's32[1]{0}', space=sflag, size = 0x4, scoped, tag = 'scoped memory for tpu_custom_call.1']
    #allocation7 [shape = 'u8[4096]{0}', space=vmem, size = 0x1000, scoped, tag = 'output window, operand 0, single buffered']
    %7 = vsyncpa [#allocation3], 0
    %8 = vsyncpa [#allocation6], 0
    %9 = vsyncpa [#allocation4], 0
    // Predicated region
    $region2: #{tpu_custom_call.1} parent=1 // pred_check
      _
    $region3: #{tpu_custom_call.1} parent=1 // pred_check_branch
      %11 = sbr.rel (0) target = $region5
    $region4: #{tpu_custom_call.1} parent=1 // pred_region
      %13 = vsyncadd [#allocation3], 0
      %s15 = sshll.u32 %s0, 4
      %s16 = int_to_ptr.hbm [resolvable:$true] %s15
      %s17 = sshll.u32 [#allocation2], 4
      %s18 = int_to_ptr.vmem [resolvable:$true] %s17
      %20 = dma.hbm_to_vmem [thread:$0]  %s16, 128, %s18, [#allocation3]
    $region5: #{tpu_custom_call.1} parent=1 // pred_fallthru
      _
    // Predicated region
    $region6: #{tpu_custom_call.1} parent=1 // pred_check
      _
    $region7: #{tpu_custom_call.1} parent=1 // pred_check_branch
      %22 = sbr.rel (0) target = $region9
    $region8: #{tpu_custom_call.1} parent=1 // pred_region
      %24 = vsyncadd [#allocation6], 0
      %s26 = sshll.u32 %s1, 4
      %s27 = int_to_ptr.hbm [resolvable:$true] %s26
      %s28 = sshll.u32 [#allocation5], 4
      %s29 = int_to_ptr.vmem [resolvable:$true] %s28
      %31 = dma.hbm_to_vmem [thread:$0]  %s27, 128, %s29, [#allocation6]
    $region9: #{tpu_custom_call.1} parent=1 // pred_fallthru
      _
    // Predicated region
    $region10: #{tpu_custom_call.1} parent=1 // pred_check
      _
    $region11: #{tpu_custom_call.1} parent=1 // pred_check_branch
      %33 = sbr.rel (0) target = $region13
    $region12: #{tpu_custom_call.1} parent=1 // pred_region
      %35 = dma.done [#allocation3], 128
    $region13: #{tpu_custom_call.1} parent=1 // pred_fallthru
      _
    // Predicated region
    $region14: #{tpu_custom_call.1} parent=1 // pred_check
      _
    $region15: #{tpu_custom_call.1} parent=1 // pred_check_branch
      %37 = sbr.rel (0) target = $region17
    $region16: #{tpu_custom_call.1} parent=1 // pred_region
      %39 = dma.done [#allocation6], 128
    $region17: #{tpu_custom_call.1} parent=1 // pred_fallthru
      _
    %v40 = vld [vmem:[#allocation2] sm:$0xff]
    %v41 = vld [vmem:[#allocation5] sm:$0xff]
    %43 = vrot.lane.b32.xlu0 %v41, 32
    %v44 = vpop.permute.xlu0 %43
    %vm46 = vcmask 261120
    %v47 = vsel %vm46, %v41, %v44
    %v48 = vadd.f32 %v40, %v47
    %vm49 = vcmask 523264
    %50 = vst.msk [vmem:[#allocation7] sm:$0xff] %vm49, %v48
    // Predicated region
    $region18: #{tpu_custom_call.1} parent=1 // pred_check
      _
    $region19: #{tpu_custom_call.1} parent=1 // pred_check_branch
      %52 = sbr.rel (0) target = $region21
    $region20: #{tpu_custom_call.1} parent=1 // pred_region
      %54 = vsyncadd [#allocation4], 0
      %s56 = sshll.u32 [#allocation7], 4
      %s57 = int_to_ptr.vmem [resolvable:$true] %s56
      %s58 = sshll.u32 %s2, 4
      %s59 = int_to_ptr.hbm [resolvable:$true] %s58
      %61 = dma.vmem_to_hbm [thread:$0]  %s57, 128, %s59, [#allocation4]
    $region21: #{tpu_custom_call.1} parent=1 // pred_fallthru
      _
    // Predicated region
    $region22: #{tpu_custom_call.1} parent=1 // pred_check
      _
    $region23: #{tpu_custom_call.1} parent=1 // pred_check_branch
      %63 = sbr.rel (0) target = $region25
    $region24: #{tpu_custom_call.1} parent=1 // pred_region
      %65 = dma.done [#allocation4], 128
    $region25: #{tpu_custom_call.1} parent=1 // pred_fallthru
      _
    %66 = vsyncpa [#allocation3], 1
    %67 = vsyncpa [#allocation6], 1
    %68 = vsyncpa [#allocation4], 1

</llo_original>
